<compile_context>
chip_gen: v5e
topology: v5e:2x2
jax: 0.10.0
libtpu: 0.0.40
codegen_flags: <defaults>
</compile_context>

<pallas_src>
import functools

import jax
import jax.numpy as jnp
from jax import lax
from jax.experimental import pallas as pl
from jax.experimental.pallas import tpu as pltpu

LANES = 128
SUBLANES = 8
CHUNK_ROWS = 64            # 8 vregs per f32 temporary inside the inner loop
EPS = 1e-07
BCE_LOG_CLAMP = -100.0     # PyTorch F.binary_cross_entropy clamps log() at -100


def _chunk_sums(pred_ref, mask_ref, tile, chunk, valid_fn):
    """Accumulate sum(m*p), sum(m+p), sum(m*(log p - log q) + log q) over the
    tile in `chunk`-row pieces so the working set stays in vregs.

    valid_fn(chunk_row0) -> (chunk, LANES) bool mask, or None for the fast
    (unmasked) path.
    """
    n_chunks = tile // chunk
    sub = chunk // SUBLANES

    def body(i, carry):
        inter, card, bce = carry
        r0 = pl.multiple_of(i * chunk, chunk)
        p = pred_ref[pl.ds(r0, chunk), :].astype(jnp.float32)
        m = mask_ref[pl.ds(r0, chunk), :].astype(jnp.float32)
        if valid_fn is not None:
            valid = valid_fn(r0)
            p = jnp.where(valid, p, 0.0)
            m = jnp.where(valid, m, 0.0)
        log_p = jnp.maximum(jnp.log(p), BCE_LOG_CLAMP)
        log_q = jnp.maximum(jnp.log(1.0 - p), BCE_LOG_CLAMP)
        # == m*log_p + (1-m)*log_q ; negated once on the scalar in the wrapper.
        bce_c = m * (log_p - log_q) + log_q
        inter = inter + jnp.sum((m * p).reshape(sub, SUBLANES, LANES), axis=0)
        card = card + jnp.sum((m + p).reshape(sub, SUBLANES, LANES), axis=0)
        bce = bce + jnp.sum(bce_c.reshape(sub, SUBLANES, LANES), axis=0)
        return inter, card, bce

    zeros = jnp.zeros((SUBLANES, LANES), jnp.float32)
    init = (zeros, zeros, zeros)
    if n_chunks == 1:
        return body(0, init)
    return lax.fori_loop(0, n_chunks, body, init)


def _seg_loss_kernel(nrows_ref, pred_ref, mask_ref, out_ref, acc_ref, *, chunk):
    # acc_ref: VMEM (3, 8, 128) f32 accumulator, persistent per core.
    c = pl.program_id(0)
    s = pl.program_id(1)
    steps = pl.num_programs(1)
    tile = pred_ref.shape[0]

    @pl.when(s == 0)
    def _():
        acc_ref[...] = jnp.zeros_like(acc_ref)

    nrows = nrows_ref[0]
    row0 = (c * steps + s) * tile
    is_full = row0 + tile <= nrows

    def add_to_acc(sums):
        inter, card, bce = sums
        acc_ref[0] = acc_ref[0] + inter
        acc_ref[1] = acc_ref[1] + card
        acc_ref[2] = acc_ref[2] + bce

    # Fast path: whole tile in range -> no iota / compare / where.
    @pl.when(is_full)
    def _():
        add_to_acc(_chunk_sums(pred_ref, mask_ref, tile, chunk, None))

    # Tail path: at most one block per core (partial last block, or the
    # duplicated block when blocks % core_splits != 0). Both p and m must stay
    # masked here: out-of-range VMEM contents may be stale garbage.
    @pl.when(jnp.logical_not(is_full))
    def _():
        ids = lax.broadcasted_iota(jnp.int32, (chunk, LANES), 0)
        thresh = nrows - row0

        def valid_fn(r0):
            return ids < (thresh - r0)

        add_to_acc(_chunk_sums(pred_ref, mask_ref, tile, chunk, valid_fn))

    @pl.when(s == steps - 1)
    def _():
        out_ref[0] = acc_ref[...]


@functools.partial(jax.jit, static_argnames=("tile_rows",))
def seg_loss(pred_seg, mask, tile_rows=8192):
    assert pred_seg.shape == mask.shape, f"{pred_seg.shape} != {mask.shape}"
    n_elems = pred_seg.size

    pred_flat = pred_seg.reshape(-1)
    mask_flat = mask.reshape(-1)

    # Aligned prefix handled by the kernel; ragged (<1024 elem) tail in JAX.
    chunk_elems = SUBLANES * LANES
    n_main = (n_elems // chunk_elems) * chunk_elems
    rows = n_main // LANES  # multiple of 8

    intersection = jnp.float32(0.0)
    cardinality = jnp.float32(0.0)
    bce_neg = jnp.float32(0.0)  # sum of m*log_p + (1-m)*log_q (un-negated BCE)

    if rows > 0:
        pred2d = pred_flat[:n_main].reshape(rows, LANES)
        mask2d = mask_flat[:n_main].reshape(rows, LANES)

        if rows >= CHUNK_ROWS:
            tile = max(CHUNK_ROWS, min(int(tile_rows), rows))
            tile = (tile // CHUNK_ROWS) * CHUNK_ROWS  # multiple of 64 rows
            chunk = CHUNK_ROWS
        else:
            tile = rows          # full-extent block for tiny inputs
            chunk = rows

        blocks = pl.cdiv(rows, tile)

        # Leading parallel axis of size 2 when possible so a 2-TC chip can
        # split the stream; harmless on 1-TC chips. With an odd block count the
        # last (c, s) re-reads a clamped block whose contribution is masked.
        core_splits = 2 if blocks >= 2 else 1
        steps = pl.cdiv(blocks, core_splits)

        def in_index(c, s, nrows_ref):
            bi = c * steps + s
            return (jnp.minimum(bi, blocks - 1), 0)

        nrows = jnp.array([rows], dtype=jnp.int32)

        in_bytes = (pred2d.dtype.itemsize + mask2d.dtype.itemsize) * n_main
        cost = pl.CostEstimate(
            flops=12 * n_main,
            transcendentals=2 * n_main,
            bytes_accessed=int(in_bytes),
        )

        partials = pl.pallas_call(
            functools.partial(_seg_loss_kernel, chunk=chunk),
            out_shape=jax.ShapeDtypeStruct(
                (core_splits, 3, SUBLANES, LANES), jnp.float32),
            grid_spec=pltpu.PrefetchScalarGridSpec(
                num_scalar_prefetch=1,
                grid=(core_splits, steps),
                in_specs=[
                    pl.BlockSpec((tile, LANES), in_index),
                    pl.BlockSpec((tile, LANES), in_index),
                ],
                out_specs=pl.BlockSpec(
                    (1, 3, SUBLANES, LANES),
                    lambda c, s, nrows_ref: (c, 0, 0, 0)),
                scratch_shapes=[pltpu.VMEM((3, SUBLANES, LANES), jnp.float32)],
            ),
            compiler_params=pltpu.CompilerParams(
                dimension_semantics=("parallel", "arbitrary"),
                vmem_limit_bytes=48 << 20,
            ),
            cost_estimate=cost,
        )(nrows, pred2d, mask2d)

        intersection = jnp.sum(partials[:, 0])
        cardinality = jnp.sum(partials[:, 1])
        bce_neg = jnp.sum(partials[:, 2])

    if n_main < n_elems:
        # Ragged tail (< 1024 elements): plain JAX, no full-array pad copy.
        p_t = pred_flat[n_main:].astype(jnp.float32)
        m_t = mask_flat[n_main:].astype(jnp.float32)
        log_p = jnp.maximum(jnp.log(p_t), BCE_LOG_CLAMP)
        log_q = jnp.maximum(jnp.log(1.0 - p_t), BCE_LOG_CLAMP)
        intersection = intersection + jnp.sum(m_t * p_t)
        cardinality = cardinality + jnp.sum(m_t + p_t)
        bce_neg = bce_neg + jnp.sum(m_t * (log_p - log_q) + log_q)

    # binary_dice_loss with smooth=0.0: single channel -> .mean() is a no-op.
    dice_score = (2.0 * intersection) / jnp.maximum(cardinality, EPS)
    seg_dice_loss = 1.0 - dice_score
    seg_bce_loss = -bce_neg / n_elems

    total = seg_dice_loss + seg_bce_loss
    return total, {"seg_dice_loss": seg_dice_loss, "seg_bce_loss": seg_bce_loss}


def _reference(pred_seg, mask):
    p = pred_seg.astype(jnp.float32).reshape(-1)
    m = mask.astype(jnp.float32).reshape(-1)
    inter = jnp.sum(m * p)
    card = jnp.sum(m + p)
    dice = 1.0 - (2.0 * inter) / jnp.maximum(card, EPS)
    log_p = jnp.maximum(jnp.log(p), BCE_LOG_CLAMP)
    log_q = jnp.maximum(jnp.log(1.0 - p), BCE_LOG_CLAMP)
    bce = jnp.mean(-(m * log_p + (1.0 - m) * log_q))
    return dice + bce, dice, bce


def _check(shape, key, dtype=jnp.float32, tile_rows=8192, rtol=1e-5, atol=1e-5):
    k1, k2 = jax.random.split(key)
    pred_seg = jax.nn.sigmoid(
        jax.random.normal(k1, shape, dtype=jnp.float32)).astype(dtype)
    mask = (jax.random.uniform(k2, shape) > 0.5).astype(dtype)

    total, aux = seg_loss(pred_seg, mask, tile_rows=tile_rows)
    total = jax.block_until_ready(total)

    ref_total, ref_dice, ref_bce = _reference(pred_seg, mask)
    assert jnp.allclose(total, ref_total, rtol=rtol, atol=atol), (
        shape, dtype, total, ref_total)
    assert jnp.allclose(aux["seg_dice_loss"], ref_dice, rtol=rtol, atol=atol)
    assert jnp.allclose(aux["seg_bce_loss"], ref_bce, rtol=rtol, atol=atol)


if __name__ == "__main__":
    key = jax.random.PRNGKey(0)
    k0, k1, k2, k3, k4 = jax.random.split(key, 5)

    # NCHW, matching the PyTorch module's expected segmentation tensors.
    _check((2, 4, 16, 16), k0)                       # small / single block
    _check((3, 4, 256, 128), k1)                     # one big tile, fast path
    # Force multiple blocks with an odd block count: exercises the core-split
    # axis, the partial-last-block masked path, and the duplicated block.
    _check((3, 4, 256, 128), k2, tile_rows=640)
    _check((2, 3, 17, 19), k3)                       # ragged numel: JAX tail fold
    _check((2, 4, 64, 64), k4, dtype=jnp.bfloat16,   # narrow dtype into kernel
           rtol=2e-5, atol=2e-5)

    print("KERNEL_OK")
</pallas_src>

<mosaic_0001>
module attributes {stable_mosaic.version = 11 : i64} {
  func.func @_seg_loss_kernel(%arg0: i32, %arg1: i32, %arg2: memref<1xi32, #tpu.memory_space<smem>>, %arg3: memref<16x128xf32, #tpu.memory_space<vmem>>, %arg4: memref<16x128xf32, #tpu.memory_space<vmem>>, %arg5: memref<1x3x8x128xf32, #tpu.memory_space<vmem>>, %arg6: memref<3x8x128xf32, #tpu.memory_space<vmem>>) attributes {dimension_semantics = [#tpu.dimension_semantics<parallel>, #tpu.dimension_semantics<arbitrary>], iteration_bounds = array<i64: 1, 1>, scalar_prefetch = 1 : i64, scratch_operands = 1 : i64, tpu.core_type = #tpu.core_type<tc>, window_params = [{transform_indices = @transform_0, window_bounds = array<i64: 16, 128>}, {transform_indices = @transform_1, window_bounds = array<i64: 16, 128>}, {transform_indices = @transform_2, window_bounds = array<i64: 1, 3, 8, 128>}]} {
    %c0_i32 = arith.constant 0 : i32
    %0 = arith.cmpi eq, %arg1, %c0_i32 : i32
    %1 = arith.extui %0 : i1 to i32
    %c0_i32_0 = arith.constant 0 : i32
    %2 = arith.cmpi ne, %1, %c0_i32_0 : i32
    scf.if %2 {
      %cst = arith.constant 0.000000e+00 : f32
      %17 = vector.broadcast %cst : f32 to vector<3x8x128xf32>
      %c0_6 = arith.constant 0 : index
      %c0_7 = arith.constant 0 : index
      %c0_8 = arith.constant 0 : index
      %18 = vector.load %arg6[%c0_6, %c0_7, %c0_8] : memref<3x8x128xf32, #tpu.memory_space<vmem>>, vector<3x8x128xf32>
      tpu.vector_store %arg6[%c0_6, %c0_7, %c0_8], %17 {strides = array<i32>} : memref<3x8x128xf32, #tpu.memory_space<vmem>>, vector<3x8x128xf32>,
    } else {
    }
    %c0 = arith.constant 0 : index
    %3 = memref.load %arg2[%c0] : memref<1xi32, #tpu.memory_space<smem>>
    %c1_i32 = arith.constant 1 : i32
    %4 = arith.muli %arg0, %c1_i32 : i32
    %5 = arith.addi %4, %arg1 : i32
    %c16_i32 = arith.constant 16 : i32
    %6 = arith.muli %5, %c16_i32 : i32
    %c16_i32_1 = arith.constant 16 : i32
    %7 = arith.addi %6, %c16_i32_1 : i32
    %8 = arith.cmpi sle, %7, %3 : i32
    %9 = arith.extui %8 : i1 to i32
    %c0_i32_2 = arith.constant 0 : i32
    %10 = arith.cmpi ne, %9, %c0_i32_2 : i32
    scf.if %10 {
      %cst = arith.constant 0.000000e+00 : f32
      %17 = vector.broadcast %cst : f32 to vector<8x128xf32>
      %c0_i32_6 = arith.constant 0 : i32
      %18 = tpu.assume_multiple %c0_i32_6, 16 : i32
      %19 = arith.index_cast %18 : i32 to index
      %c0_7 = arith.constant 0 : index
      %20 = vector.load %arg3[%19, %c0_7] : memref<16x128xf32, #tpu.memory_space<vmem>>, vector<16x128xf32>
      %21 = arith.index_cast %18 : i32 to index
      %c0_8 = arith.constant 0 : index
      %22 = vector.load %arg4[%21, %c0_8] : memref<16x128xf32, #tpu.memory_space<vmem>>, vector<16x128xf32>
      %23 = math.log %20 : vector<16x128xf32>
      %cst_9 = arith.constant -1.000000e+02 : f32
      %24 = vector.broadcast %cst_9 : f32 to vector<16x128xf32>
      %25 = arith.maximumf %23, %24 : vector<16x128xf32>
      %cst_10 = arith.constant 1.000000e+00 : f32
      %26 = vector.broadcast %cst_10 : f32 to vector<16x128xf32>
      %27 = arith.subf %26, %20 : vector<16x128xf32>
      %28 = math.log %27 : vector<16x128xf32>
      %cst_11 = arith.constant -1.000000e+02 : f32
      %29 = vector.broadcast %cst_11 : f32 to vector<16x128xf32>
      %30 = arith.maximumf %28, %29 : vector<16x128xf32>
      %31 = arith.subf %25, %30 : vector<16x128xf32>
      %32 = arith.mulf %22, %31 : vector<16x128xf32>
      %33 = arith.addf %32, %30 : vector<16x128xf32>
      %34 = arith.mulf %22, %20 : vector<16x128xf32>
      %35 = vector.shape_cast %34 : vector<16x128xf32> to vector<2x8x128xf32>
      %cst_12 = arith.constant dense<0.000000e+00> : vector<8x128xf32>
      %36 = vector.multi_reduction <add>, %35, %cst_12 [0] : vector<2x8x128xf32> to vector<8x128xf32>
      %37 = arith.addf %17, %36 : vector<8x128xf32>
      %38 = arith.addf %22, %20 : vector<16x128xf32>
      %39 = vector.shape_cast %38 : vector<16x128xf32> to vector<2x8x128xf32>
      %cst_13 = arith.constant dense<0.000000e+00> : vector<8x128xf32>
      %40 = vector.multi_reduction <add>, %39, %cst_13 [0] : vector<2x8x128xf32> to vector<8x128xf32>
      %41 = arith.addf %17, %40 : vector<8x128xf32>
      %42 = vector.shape_cast %33 : vector<16x128xf32> to vector<2x8x128xf32>
      %cst_14 = arith.constant dense<0.000000e+00> : vector<8x128xf32>
      %43 = vector.multi_reduction <add>, %42, %cst_14 [0] : vector<2x8x128xf32> to vector<8x128xf32>
      %44 = arith.addf %17, %43 : vector<8x128xf32>
      %c0_15 = arith.constant 0 : index
      %c0_16 = arith.constant 0 : index
      %c0_17 = arith.constant 0 : index
      %45 = vector.load %arg6[%c0_15, %c0_16, %c0_17] : memref<3x8x128xf32, #tpu.memory_space<vmem>>, vector<1x8x128xf32>
      %46 = vector.shape_cast %45 : vector<1x8x128xf32> to vector<8x128xf32>
      %47 = arith.addf %46, %37 : vector<8x128xf32>
      %c0_18 = arith.constant 0 : index
      %c0_19 = arith.constant 0 : index
      %c0_20 = arith.constant 0 : index
      %48 = vector.load %arg6[%c0_18, %c0_19, %c0_20] : memref<3x8x128xf32, #tpu.memory_space<vmem>>, vector<1x8x128xf32>
      %49 = vector.shape_cast %48 : vector<1x8x128xf32> to vector<8x128xf32>
      %50 = vector.shape_cast %47 : vector<8x128xf32> to vector<1x8x128xf32>
      tpu.vector_store %arg6[%c0_18, %c0_19, %c0_20], %50 {strides = array<i32>} : memref<3x8x128xf32, #tpu.memory_space<vmem>>, vector<1x8x128xf32>,
      %c1 = arith.constant 1 : index
      %c0_21 = arith.constant 0 : index
      %c0_22 = arith.constant 0 : index
      %51 = vector.load %arg6[%c1, %c0_21, %c0_22] : memref<3x8x128xf32, #tpu.memory_space<vmem>>, vector<1x8x128xf32>
      %52 = vector.shape_cast %51 : vector<1x8x128xf32> to vector<8x128xf32>
      %53 = arith.addf %52, %41 : vector<8x128xf32>
      %c1_23 = arith.constant 1 : index
      %c0_24 = arith.constant 0 : index
      %c0_25 = arith.constant 0 : index
      %54 = vector.load %arg6[%c1_23, %c0_24, %c0_25] : memref<3x8x128xf32, #tpu.memory_space<vmem>>, vector<1x8x128xf32>
      %55 = vector.shape_cast %54 : vector<1x8x128xf32> to vector<8x128xf32>
      %56 = vector.shape_cast %53 : vector<8x128xf32> to vector<1x8x128xf32>
      tpu.vector_store %arg6[%c1_23, %c0_24, %c0_25], %56 {strides = array<i32>} : memref<3x8x128xf32, #tpu.memory_space<vmem>>, vector<1x8x128xf32>,
      %c2 = arith.constant 2 : index
      %c0_26 = arith.constant 0 : index
      %c0_27 = arith.constant 0 : index
      %57 = vector.load %arg6[%c2, %c0_26, %c0_27] : memref<3x8x128xf32, #tpu.memory_space<vmem>>, vector<1x8x128xf32>
      %58 = vector.shape_cast %57 : vector<1x8x128xf32> to vector<8x128xf32>
      %59 = arith.addf %58, %44 : vector<8x128xf32>
      %c2_28 = arith.constant 2 : index
      %c0_29 = arith.constant 0 : index
      %c0_30 = arith.constant 0 : index
      %60 = vector.load %arg6[%c2_28, %c0_29, %c0_30] : memref<3x8x128xf32, #tpu.memory_space<vmem>>, vector<1x8x128xf32>
      %61 = vector.shape_cast %60 : vector<1x8x128xf32> to vector<8x128xf32>
      %62 = vector.shape_cast %59 : vector<8x128xf32> to vector<1x8x128xf32>
      tpu.vector_store %arg6[%c2_28, %c0_29, %c0_30], %62 {strides = array<i32>} : memref<3x8x128xf32, #tpu.memory_space<vmem>>, vector<1x8x128xf32>,
    } else {
    }
    %true = arith.constant true
    %11 = arith.xori %8, %true : i1
    %12 = arith.extui %11 : i1 to i32
    %c0_i32_3 = arith.constant 0 : i32
    %13 = arith.cmpi ne, %12, %c0_i32_3 : i32
    scf.if %13 {
      %17 = tpu.iota {dimensions = array<i32: 0>} : vector<16x128xi32>
      %18 = arith.subi %3, %6 : i32
      %cst = arith.constant 0.000000e+00 : f32
      %19 = vector.broadcast %cst : f32 to vector<8x128xf32>
      %c0_i32_6 = arith.constant 0 : i32
      %20 = tpu.assume_multiple %c0_i32_6, 16 : i32
      %21 = arith.index_cast %20 : i32 to index
      %c0_7 = arith.constant 0 : index
      %22 = vector.load %arg3[%21, %c0_7] : memref<16x128xf32, #tpu.memory_space<vmem>>, vector<16x128xf32>
      %23 = arith.index_cast %20 : i32 to index
      %c0_8 = arith.constant 0 : index
      %24 = vector.load %arg4[%23, %c0_8] : memref<16x128xf32, #tpu.memory_space<vmem>>, vector<16x128xf32>
      %25 = arith.subi %18, %20 : i32
      %26 = vector.broadcast %25 : i32 to vector<16x128xi32>
      %27 = arith.cmpi slt, %17, %26 : vector<16x128xi32>
      %cst_9 = arith.constant 0.000000e+00 : f32
      %28 = vector.broadcast %cst_9 : f32 to vector<16x128xf32>
      %29 = arith.select %27, %22, %28 : vector<16x128xi1>, vector<16x128xf32>
      %cst_10 = arith.constant 0.000000e+00 : f32
      %30 = vector.broadcast %cst_10 : f32 to vector<16x128xf32>
      %31 = arith.select %27, %24, %30 : vector<16x128xi1>, vector<16x128xf32>
      %32 = math.log %29 : vector<16x128xf32>
      %cst_11 = arith.constant -1.000000e+02 : f32
      %33 = vector.broadcast %cst_11 : f32 to vector<16x128xf32>
      %34 = arith.maximumf %32, %33 : vector<16x128xf32>
      %cst_12 = arith.constant 1.000000e+00 : f32
      %35 = vector.broadcast %cst_12 : f32 to vector<16x128xf32>
      %36 = arith.subf %35, %29 : vector<16x128xf32>
      %37 = math.log %36 : vector<16x128xf32>
      %cst_13 = arith.constant -1.000000e+02 : f32
      %38 = vector.broadcast %cst_13 : f32 to vector<16x128xf32>
      %39 = arith.maximumf %37, %38 : vector<16x128xf32>
      %40 = arith.subf %34, %39 : vector<16x128xf32>
      %41 = arith.mulf %31, %40 : vector<16x128xf32>
      %42 = arith.addf %41, %39 : vector<16x128xf32>
      %43 = arith.mulf %31, %29 : vector<16x128xf32>
      %44 = vector.shape_cast %43 : vector<16x128xf32> to vector<2x8x128xf32>
      %cst_14 = arith.constant dense<0.000000e+00> : vector<8x128xf32>
      %45 = vector.multi_reduction <add>, %44, %cst_14 [0] : vector<2x8x128xf32> to vector<8x128xf32>
      %46 = arith.addf %19, %45 : vector<8x128xf32>
      %47 = arith.addf %31, %29 : vector<16x128xf32>
      %48 = vector.shape_cast %47 : vector<16x128xf32> to vector<2x8x128xf32>
      %cst_15 = arith.constant dense<0.000000e+00> : vector<8x128xf32>
      %49 = vector.multi_reduction <add>, %48, %cst_15 [0] : vector<2x8x128xf32> to vector<8x128xf32>
      %50 = arith.addf %19, %49 : vector<8x128xf32>
      %51 = vector.shape_cast %42 : vector<16x128xf32> to vector<2x8x128xf32>
      %cst_16 = arith.constant dense<0.000000e+00> : vector<8x128xf32>
      %52 = vector.multi_reduction <add>, %51, %cst_16 [0] : vector<2x8x128xf32> to vector<8x128xf32>
      %53 = arith.addf %19, %52 : vector<8x128xf32>
      %c0_17 = arith.constant 0 : index
      %c0_18 = arith.constant 0 : index
      %c0_19 = arith.constant 0 : index
      %54 = vector.load %arg6[%c0_17, %c0_18, %c0_19] : memref<3x8x128xf32, #tpu.memory_space<vmem>>, vector<1x8x128xf32>
      %55 = vector.shape_cast %54 : vector<1x8x128xf32> to vector<8x128xf32>
      %56 = arith.addf %55, %46 : vector<8x128xf32>
      %c0_20 = arith.constant 0 : index
      %c0_21 = arith.constant 0 : index
      %c0_22 = arith.constant 0 : index
      %57 = vector.load %arg6[%c0_20, %c0_21, %c0_22] : memref<3x8x128xf32, #tpu.memory_space<vmem>>, vector<1x8x128xf32>
      %58 = vector.shape_cast %57 : vector<1x8x128xf32> to vector<8x128xf32>
      %59 = vector.shape_cast %56 : vector<8x128xf32> to vector<1x8x128xf32>
      tpu.vector_store %arg6[%c0_20, %c0_21, %c0_22], %59 {strides = array<i32>} : memref<3x8x128xf32, #tpu.memory_space<vmem>>, vector<1x8x128xf32>,
      %c1 = arith.constant 1 : index
      %c0_23 = arith.constant 0 : index
      %c0_24 = arith.constant 0 : index
      %60 = vector.load %arg6[%c1, %c0_23, %c0_24] : memref<3x8x128xf32, #tpu.memory_space<vmem>>, vector<1x8x128xf32>
      %61 = vector.shape_cast %60 : vector<1x8x128xf32> to vector<8x128xf32>
      %62 = arith.addf %61, %50 : vector<8x128xf32>
      %c1_25 = arith.constant 1 : index
      %c0_26 = arith.constant 0 : index
      %c0_27 = arith.constant 0 : index
      %63 = vector.load %arg6[%c1_25, %c0_26, %c0_27] : memref<3x8x128xf32, #tpu.memory_space<vmem>>, vector<1x8x128xf32>
      %64 = vector.shape_cast %63 : vector<1x8x128xf32> to vector<8x128xf32>
      %65 = vector.shape_cast %62 : vector<8x128xf32> to vector<1x8x128xf32>
      tpu.vector_store %arg6[%c1_25, %c0_26, %c0_27], %65 {strides = array<i32>} : memref<3x8x128xf32, #tpu.memory_space<vmem>>, vector<1x8x128xf32>,
      %c2 = arith.constant 2 : index
      %c0_28 = arith.constant 0 : index
      %c0_29 = arith.constant 0 : index
      %66 = vector.load %arg6[%c2, %c0_28, %c0_29] : memref<3x8x128xf32, #tpu.memory_space<vmem>>, vector<1x8x128xf32>
      %67 = vector.shape_cast %66 : vector<1x8x128xf32> to vector<8x128xf32>
      %68 = arith.addf %67, %53 : vector<8x128xf32>
      %c2_30 = arith.constant 2 : index
      %c0_31 = arith.constant 0 : index
      %c0_32 = arith.constant 0 : index
      %69 = vector.load %arg6[%c2_30, %c0_31, %c0_32] : memref<3x8x128xf32, #tpu.memory_space<vmem>>, vector<1x8x128xf32>
      %70 = vector.shape_cast %69 : vector<1x8x128xf32> to vector<8x128xf32>
      %71 = vector.shape_cast %68 : vector<8x128xf32> to vector<1x8x128xf32>
      tpu.vector_store %arg6[%c2_30, %c0_31, %c0_32], %71 {strides = array<i32>} : memref<3x8x128xf32, #tpu.memory_space<vmem>>, vector<1x8x128xf32>,
    } else {
    }
    %c0_i32_4 = arith.constant 0 : i32
    %14 = arith.cmpi eq, %arg1, %c0_i32_4 : i32
    %15 = arith.extui %14 : i1 to i32
    %c0_i32_5 = arith.constant 0 : i32
    %16 = arith.cmpi ne, %15, %c0_i32_5 : i32
    scf.if %16 {
      %c0_6 = arith.constant 0 : index
      %c0_7 = arith.constant 0 : index
      %c0_8 = arith.constant 0 : index
      %17 = vector.load %arg6[%c0_6, %c0_7, %c0_8] : memref<3x8x128xf32, #tpu.memory_space<vmem>>, vector<3x8x128xf32>
      %c0_9 = arith.constant 0 : index
      %c0_10 = arith.constant 0 : index
      %c0_11 = arith.constant 0 : index
      %c0_12 = arith.constant 0 : index
      %18 = vector.load %arg5[%c0_9, %c0_10, %c0_11, %c0_12] : memref<1x3x8x128xf32, #tpu.memory_space<vmem>>, vector<1x3x8x128xf32>
      %19 = vector.shape_cast %18 : vector<1x3x8x128xf32> to vector<3x8x128xf32>
      %20 = vector.shape_cast %17 : vector<3x8x128xf32> to vector<1x3x8x128xf32>
      tpu.vector_store %arg5[%c0_9, %c0_10, %c0_11, %c0_12], %20 {strides = array<i32>} : memref<1x3x8x128xf32, #tpu.memory_space<vmem>>, vector<1x3x8x128xf32>,
    } else {
    }
    return
  }
  func.func @transform_0(%arg0: i32, %arg1: i32, %arg2: memref<1xi32, #tpu.memory_space<smem>>) -> (i32, i32) {
    %c1_i32 = arith.constant 1 : i32
    %0 = arith.muli %arg0, %c1_i32 : i32
    %1 = arith.addi %0, %arg1 : i32
    %c0_i32 = arith.constant 0 : i32
    %2 = arith.minsi %1, %c0_i32 : i32
    %c0_i32_0 = arith.constant 0 : i32
    %c0_i32_1 = arith.constant 0 : i32
    return %2, %c0_i32_0 : i32, i32
  }
  func.func @transform_1(%arg0: i32, %arg1: i32, %arg2: memref<1xi32, #tpu.memory_space<smem>>) -> (i32, i32) {
    %c1_i32 = arith.constant 1 : i32
    %0 = arith.muli %arg0, %c1_i32 : i32
    %1 = arith.addi %0, %arg1 : i32
    %c0_i32 = arith.constant 0 : i32
    %2 = arith.minsi %1, %c0_i32 : i32
    %c0_i32_0 = arith.constant 0 : i32
    %c0_i32_1 = arith.constant 0 : i32
    return %2, %c0_i32_0 : i32, i32
  }
  func.func @transform_2(%arg0: i32, %arg1: i32, %arg2: memref<1xi32, #tpu.memory_space<smem>>) -> (i32, i32, i32, i32) {
    %c0_i32 = arith.constant 0 : i32
    %c0_i32_0 = arith.constant 0 : i32
    %c0_i32_1 = arith.constant 0 : i32
    %c0_i32_2 = arith.constant 0 : i32
    return %arg0, %c0_i32, %c0_i32_0, %c0_i32_1 : i32, i32, i32, i32
  }
}

</mosaic_0001>

<llo_original>
// kernel: seg_loss.1
$region0: #{seg_loss.1}
  #allocation0 [shape = 'u32[]', space=smem, size = 0x4, offset = 0x4, fixed_abs, tag = 'smem constant byte address 0x4 - core index']
  #allocation1 [shape = 'u32[72,128]{1,0:T(1,128)}', space=vmem, size = 0x9000, scoped, tag = 'internal scratch']
  #allocation2 [shape = 'f32[3,8,128]{2,1,0:T(8,128)}', space=vmem, size = 0x3000, scoped, tag = 'scratch operand']
  #allocation3 [shape = 's32[1]{0}', space=sflag, size = 0x4, scoped, tag = 'scoped memory for seg_loss.1']
  #allocation4 [shape = 's32[1]{0:T(128)S(6)}', space=smem, size = 0x200, scoped, tag = 'prefetched SMEM operand 0']
  %s0 = inlined_call_operand.<no memory space> [shape: s32[1], index: 0, kind: input, shape index: {}]
  %s1 = inlined_call_operand.vmem [shape: f32[16,128], index: 1, kind: input, shape index: {}]
  %s2 = inlined_call_operand.vmem [shape: f32[16,128], index: 2, kind: input, shape index: {}]
  %s3 = inlined_call_operand.vmem [shape: f32[1,3,8,128], index: 3, kind: output, shape index: {}]
  %s4 = sld [smem:[#allocation0]]
  $region34: #{seg_loss.1} parent=0
    _
  %s6 = ssub.s32 1, %s4
  %s7 = scalar_select 0, %s6, %s4
  %8 = sst [smem:[#allocation4]] %s0
  // Predicated region
  $region2: #{seg_loss.1} parent=0 // pred_check
    _
  $region3: #{seg_loss.1} parent=0 // pred_check_branch
    %10 = sbr.rel (0) target = $region5
  $region4: #{seg_loss.1} parent=0 // pred_region
    %s11 = sadd.s32 0, 0
    %p12 = scmp.lt.s32.totalorder %s11, 0
    %s13 = scalar_select %p12, %s11, 0
    %s14 = smul.u32 2, %s13
    %p15 = scmp.lt.s32.totalorder %s14, 1
    %s16 = scalar_select %p15, %s14, 1
    %s17 = smul.addr %s16, 8
    %s18 = scalar_lea.vmem %s1, %s17
    %s19 = sadd.s32 0, 0
    %p20 = scmp.lt.s32.totalorder %s19, 0
    %s21 = scalar_select %p20, %s19, 0
    %s22 = smul.u32 2, %s21
  $region5: #{seg_loss.1} parent=0 // pred_fallthru
    _
  // Predicated region
  $region6: #{seg_loss.1} parent=0 // pred_check
    _
  $region7: #{seg_loss.1} parent=0 // pred_check_branch
    %24 = sbr.rel (0) target = $region9
  $region8: #{seg_loss.1} parent=0 // pred_region
    %s25 = sadd.s32 0, 0
    %p26 = scmp.lt.s32.totalorder %s25, 0
    %s27 = scalar_select %p26, %s25, 0
    %s28 = smul.u32 2, %s27
    %p29 = scmp.lt.s32.totalorder %s28, 1
    %s30 = scalar_select %p29, %s28, 1
    %s31 = smul.addr %s30, 8
    %s32 = scalar_lea.vmem %s2, %s31
    %s33 = sadd.s32 0, 0
    %p34 = scmp.lt.s32.totalorder %s33, 0
    %s35 = scalar_select %p34, %s33, 0
    %s36 = smul.u32 2, %s35
  $region9: #{seg_loss.1} parent=0 // pred_fallthru
    _
  %s37 = sadd.s32 0, 0
  %p38 = scmp.lt.s32.totalorder %s37, 0
  %s39 = scalar_select %p38, %s37, 0
  %s40 = smul.u32 2, %s39
  %p41 = scmp.lt.s32.totalorder %s40, 1
  %s42 = scalar_select %p41, %s40, 1
  %s43 = smul.addr %s42, 8
  %s44 = scalar_lea.vmem %s1, %s43
  %s45 = sadd.s32 0, 0
  %p46 = scmp.lt.s32.totalorder %s45, 0
  %s47 = scalar_select %p46, %s45, 0
  %s48 = smul.u32 2, %s47
  %p49 = scmp.lt.s32.totalorder %s48, 1
  %s50 = scalar_select %p49, %s48, 1
  %s51 = smul.addr %s50, 8
  %s52 = scalar_lea.vmem %s2, %s51
  %s53 = sadd.s32 0, 0
  %p54 = scmp.lt.s32.totalorder %s53, 0
  %s55 = scalar_select %p54, %s53, 0
  %s56 = smul.u32 2, %s55
  %p57 = scmp.lt.s32.totalorder %s56, 1
  %s58 = scalar_select %p57, %s56, 1
  %s59 = smul.addr %s58, 8
  %s60 = scalar_lea.vmem %s1, %s59
  %s61 = sadd.s32 0, 0
  %p62 = scmp.lt.s32.totalorder %s61, 0
  %s63 = scalar_select %p62, %s61, 0
  %s64 = smul.u32 2, %s63
  %s65 = sadd.s32 0, 0
  %p66 = scmp.lt.s32.totalorder %s65, 0
  %s67 = scalar_select %p66, %s65, 0
  %s68 = smul.u32 2, %s67
  %p69 = scmp.lt.s32.totalorder %s68, 1
  %s70 = scalar_select %p69, %s68, 1
  %s71 = smul.addr %s70, 8
  %s72 = scalar_lea.vmem %s2, %s71
  %s73 = sadd.s32 0, 0
  %p74 = scmp.lt.s32.totalorder %s73, 0
  %s75 = scalar_select %p74, %s73, 0
  %s76 = smul.u32 2, %s75
  %p77 = scmp.eq.s32.totalorder 0, 0
  // Predicated region
  $region10: #{seg_loss.1} parent=0 // pred_check
    %p78 = pneg %p77
  $region11: #{seg_loss.1} parent=0 // pred_check_branch
    %80 = sbr.rel (%p78) target = $region13
  $region12: #{seg_loss.1} parent=0 // pred_region
    %81 = vst [vmem:[#allocation2] sm:$0xff] 0.0
    %82 = vst [vmem:[#allocation2 + $0x8] sm:$0xff] 0.0
    %83 = vst [vmem:[#allocation2 + $0x10] sm:$0xff] 0.0
  $region13: #{seg_loss.1} parent=0 // pred_fallthru
    _
  %s84 = sld [smem:[#allocation4]]
  %s85 = sadd.s32 0, 0
  %s86 = smul.u32 %s85, 16
  %s87 = sadd.s32 %s86, 16
  %p88 = scmp.le.s32.totalorder %s87, %s84
  // Predicated region
  $region14: #{seg_loss.1} parent=0 // pred_check
    %p89 = pneg %p88
  $region15: #{seg_loss.1} parent=0 // pred_check_branch
    %91 = sbr.rel (%p89) target = $region17
  $region16: #{seg_loss.1} parent=0 // pred_region
    %v92 = vld [vmem:[%s60] sm:$0xff]
    %v93 = vld [vmem:[%s60 + $0x8] sm:$0xff]
    %v94 = vld [vmem:[%s72] sm:$0xff]
    %v95 = vld [vmem:[%s72 + $0x8] sm:$0xff]
    %v96 = vlog2.pop %v92
    %v97 = vmul.f32 %v96, 0.6931472
    %v98 = vlog2.pop %v93
    %v99 = vmul.f32 %v98, 0.6931472
    %v100 = vmax.f32 %v97, -100.0
    %v101 = vmax.f32 %v99, -100.0
    %v102 = vsub.f32 1.0, %v92
    %v103 = vsub.f32 1.0, %v93
    %v104 = vlog2.pop %v102
    %v105 = vmul.f32 %v104, 0.6931472
    %v106 = vlog2.pop %v103
    %v107 = vmul.f32 %v106, 0.6931472
    %v108 = vmax.f32 %v105, -100.0
    %v109 = vmax.f32 %v107, -100.0
    %v110 = vsub.f32 %v100, %v108
    %v111 = vsub.f32 %v101, %v109
    %v112 = vmul.f32 %v94, %v110
    %v113 = vmul.f32 %v95, %v111
    %v114 = vadd.f32 %v112, %v108
    %v115 = vadd.f32 %v113, %v109
    %v116 = vmul.f32 %v94, %v92
    %v117 = vmul.f32 %v95, %v93
    %v118 = vadd.f32 %v116, %v117
    %v119 = vadd.f32 %v118, 0.0
    %v120 = vadd.f32 %v94, %v92
    %v121 = vadd.f32 %v95, %v93
    %v122 = vadd.f32 %v120, %v121
    %v123 = vadd.f32 %v122, 0.0
    %v124 = vadd.f32 %v114, %v115
    %v125 = vadd.f32 %v124, 0.0
    %v126 = vld [vmem:[#allocation2] sm:$0xff]
    %v127 = vadd.f32 %v126, %v119
    %128 = vst [vmem:[#allocation2] sm:$0xff] %v127
    %s129 = scalar_lea.vmem [#allocation2], 8
    %v130 = vld [vmem:[%s129] sm:$0xff]
    %v131 = vadd.f32 %v130, %v123
    %132 = vst [vmem:[%s129] sm:$0xff] %v131
    %s133 = scalar_lea.vmem [#allocation2], 16
    %v134 = vld [vmem:[%s133] sm:$0xff]
    %v135 = vadd.f32 %v134, %v125
    %136 = vst [vmem:[%s133] sm:$0xff] %v135
  $region17: #{seg_loss.1} parent=0 // pred_fallthru
    _
  %p137 = scmp.gt.s32.totalorder %s87, %s84
  // Predicated region
  $region18: #{seg_loss.1} parent=0 // pred_check
    %p138 = pneg %p137
  $region19: #{seg_loss.1} parent=0 // pred_check_branch
    %140 = sbr.rel (%p138) target = $region21
  $region20: #{seg_loss.1} parent=0 // pred_region
    %v141 = vlaneseq
    %v142 = vshrl.u32 %v141, 7
    %v143 = vadd.s32 %v142, 8
    %s144 = ssub.s32 %s84, %s86
    %v145 = vld [vmem:[%s60] sm:$0xff]
    %v146 = vld [vmem:[%s60 + $0x8] sm:$0xff]
    %v147 = vld [vmem:[%s72] sm:$0xff]
    %v148 = vld [vmem:[%s72 + $0x8] sm:$0xff]
    %s149 = ssub.s32 %s144, 0
    %v150 = vstv %s149
    %vm151 = vcmp.lt.s32.totalorder %v142, %v150
    %vm152 = vcmp.lt.s32.totalorder %v143, %v150
    %v153 = vsel %vm151, %v145, 0.0
    %v154 = vsel %vm152, %v146, 0.0
    %v155 = vsel %vm151, %v147, 0.0
    %v156 = vsel %vm152, %v148, 0.0
    %v157 = vlog2.pop %v153
    %v158 = vmul.f32 %v157, 0.6931472
    %v159 = vlog2.pop %v154
    %v160 = vmul.f32 %v159, 0.6931472
    %v161 = vmax.f32 %v158, -100.0
    %v162 = vmax.f32 %v160, -100.0
    %v163 = vsub.f32 1.0, %v153
    %v164 = vsub.f32 1.0, %v154
    %v165 = vlog2.pop %v163
    %v166 = vmul.f32 %v165, 0.6931472
    %v167 = vlog2.pop %v164
    %v168 = vmul.f32 %v167, 0.6931472
    %v169 = vmax.f32 %v166, -100.0
    %v170 = vmax.f32 %v168, -100.0
    %v171 = vsub.f32 %v161, %v169
    %v172 = vsub.f32 %v162, %v170
    %v173 = vmul.f32 %v155, %v171
    %v174 = vmul.f32 %v156, %v172
    %v175 = vadd.f32 %v173, %v169
    %v176 = vadd.f32 %v174, %v170
    %v177 = vmul.f32 %v155, %v153
    %v178 = vmul.f32 %v156, %v154
    %v179 = vadd.f32 %v177, %v178
    %v180 = vadd.f32 %v179, 0.0
    %v181 = vadd.f32 %v155, %v153
    %v182 = vadd.f32 %v156, %v154
    %v183 = vadd.f32 %v181, %v182
    %v184 = vadd.f32 %v183, 0.0
    %v185 = vadd.f32 %v175, %v176
    %v186 = vadd.f32 %v185, 0.0
    %v187 = vld [vmem:[#allocation2] sm:$0xff]
    %v188 = vadd.f32 %v187, %v180
    %189 = vst [vmem:[#allocation2] sm:$0xff] %v188
    %s190 = scalar_lea.vmem [#allocation2], 8
    %v191 = vld [vmem:[%s190] sm:$0xff]
    %v192 = vadd.f32 %v191, %v184
    %193 = vst [vmem:[%s190] sm:$0xff] %v192
    %s194 = scalar_lea.vmem [#allocation2], 16
    %v195 = vld [vmem:[%s194] sm:$0xff]
    %v196 = vadd.f32 %v195, %v186
    %197 = vst [vmem:[%s194] sm:$0xff] %v196
  $region21: #{seg_loss.1} parent=0 // pred_fallthru
    _
  // Predicated region
  $region22: #{seg_loss.1} parent=0 // pred_check
    %p198 = pneg %p77
  $region23: #{seg_loss.1} parent=0 // pred_check_branch
    %200 = sbr.rel (%p198) target = $region25
  $region24: #{seg_loss.1} parent=0 // pred_region
    %v201 = vld [vmem:[#allocation2] sm:$0xff]
    %v202 = vld [vmem:[#allocation2 + $0x8] sm:$0xff]
    %v203 = vld [vmem:[#allocation2 + $0x10] sm:$0xff]
    %204 = vst [vmem:[%s3] sm:$0xff] %v201
    %205 = vst [vmem:[%s3 + $0x8] sm:$0xff] %v202
    %206 = vst [vmem:[%s3 + $0x10] sm:$0xff] %v203
  $region25: #{seg_loss.1} parent=0 // pred_fallthru
    _
  // Predicated region
  $region26: #{seg_loss.1} parent=0 // pred_check
    _
  $region27: #{seg_loss.1} parent=0 // pred_check_branch
    %208 = sbr.rel (0) target = $region29
  $region28: #{seg_loss.1} parent=0 // pred_region
    _
  $region29: #{seg_loss.1} parent=0 // pred_fallthru
    _
  // Predicated region
  $region30: #{seg_loss.1} parent=0 // pred_check
    _
  $region31: #{seg_loss.1} parent=0 // pred_check_branch
    %210 = sbr.rel (0) target = $region33
  $region32: #{seg_loss.1} parent=0 // pred_region
    _
  $region33: #{seg_loss.1} parent=0 // pred_fallthru
    _

</llo_original>
